<compile_context>
chip_gen: v5e
topology: v5e:2x2
jax: 0.10.0
libtpu: 0.0.40
codegen_flags: <defaults>
</compile_context>

<pallas_src>
import functools

import jax
import jax.numpy as jnp
from jax.experimental import pallas as pl
from jax.experimental.pallas import tpu as pltpu

_W4_PAD = 128   # lane-dense padded width of the fc4 weight used on the MXU
_OUT = 3        # true output width (number of actions)


def _round_up(x, m):
    return ((x + m - 1) // m) * m


def _cdiv(a, b):
    return -(-a // b)


def _mlp_kernel(x_ref, w1_ref, w2_ref, w3_ref, w4_ref, b_ref, o_ref):
    """Fused 4-layer MLP (matmul + bias + ReLU) for one (TB, 8) batch tile.

    Weights w1..w3 are bf16 (in, out); w4 is bf16 (16, 128) zero-padded.
    Biases are packed into f32 b_ref of shape (4, 128): row 0 -> b1[:32],
    row 1 -> b2[:64], row 2 -> b3[:16], row 3 -> b4[:3].
    Matmuls run with bf16 operands and f32 accumulation; bias-add / ReLU in f32.
    """
    bf16 = jnp.bfloat16
    x = x_ref[...].astype(bf16)                      # (TB, 8) bf16

    b1 = b_ref[0:1, 0:32]                            # static slices of the f32 slab
    b2 = b_ref[1:2, 0:64]
    b3 = b_ref[2:3, 0:16]
    b4 = b_ref[3:4, 0:_OUT]

    h1 = jnp.dot(x, w1_ref[...], preferred_element_type=jnp.float32) + b1
    h1 = jnp.maximum(h1, 0.0).astype(bf16)

    h2 = jnp.dot(h1, w2_ref[...], preferred_element_type=jnp.float32) + b2
    h2 = jnp.maximum(h2, 0.0).astype(bf16)

    h3 = jnp.dot(h2, w3_ref[...], preferred_element_type=jnp.float32) + b3
    h3 = jnp.maximum(h3, 0.0).astype(bf16)

    out128 = jnp.dot(h3, w4_ref[...], preferred_element_type=jnp.float32)
    o_ref[...] = (out128[:, :_OUT] + b4).astype(o_ref.dtype)   # (TB, 3) store


def _tile_spec(block_shape):
    """Batch-tiled spec: block index advances with the grid step."""
    return pl.BlockSpec(block_shape, lambda i: (i, 0))


def _resident_spec(shape):
    """Full-array block with a constant index_map -> stays VMEM-resident."""
    return pl.BlockSpec(tuple(shape), lambda i: (0, 0))


def _compute_tiling(B, block_b):
    """Pick (TB, B_pad, num_blocks): >=2 even blocks when possible, TB % 16 == 0,
    padding bounded to < one 16-row sublane group (not < one full tile)."""
    nb = max(2, _cdiv(B, block_b))
    nb += nb % 2                       # even block count for v7x's 2 TCs
    TB = min(block_b, _round_up(_cdiv(B, nb), 16))
    TB = max(TB, 16)
    B_pad = _round_up(B, TB)
    return TB, B_pad, B_pad // TB


@functools.partial(jax.jit, static_argnames=("block_b",))
def deep_q_forward(observation, params, *, block_b=4096):
    """DeepQNetwork forward pass as a batch-gridded Pallas kernel.

    observation: (B, 8) float32
    params: dict from init_params() (kernel uses w1..w3, w4p, b_packed).
    Returns (B, 3) float32.
    """
    observation = jnp.asarray(observation, jnp.float32)
    B, F = observation.shape
    assert F == 8, f"expected 8 input features, got {F}"
    assert block_b % 16 == 0

    w1, w2, w3 = params["w1"], params["w2"], params["w3"]   # bf16, (in, out)
    w4p = params["w4p"]            # bf16, (16, 128) zero-padded
    b_packed = params["b_packed"]  # f32,  (4, 128)

    TB, B_pad, num_blocks = _compute_tiling(B, block_b)
    if B_pad != B:
        observation = jnp.pad(observation, ((0, B_pad - B), (0, 0)))

    flops_per_row = 2 * (8 * 32 + 32 * 64 + 64 * 16 + 16 * _W4_PAD)
    bytes_accessed = (
        4 * B_pad * 8 + 4 * B_pad * _OUT                                  # obs + out
        + 2 * (8 * 32 + 32 * 64 + 64 * 16 + 16 * _W4_PAD)                 # bf16 weights
        + 4 * 4 * _W4_PAD                                                 # bias slab
    )

    out_padded = pl.pallas_call(
        _mlp_kernel,
        out_shape=jax.ShapeDtypeStruct((B_pad, _OUT), jnp.float32),
        grid=(num_blocks,),
        in_specs=[
            _tile_spec((TB, 8)),          # observation: streamed per tile
            _resident_spec(w1.shape),     # weights/biases: VMEM-resident
            _resident_spec(w2.shape),
            _resident_spec(w3.shape),
            _resident_spec(w4p.shape),
            _resident_spec(b_packed.shape),
        ],
        out_specs=_tile_spec((TB, _OUT)),
        compiler_params=pltpu.CompilerParams(
            dimension_semantics=("parallel",),
        ),
        cost_estimate=pl.CostEstimate(
            flops=flops_per_row * B_pad,
            transcendentals=0,
            bytes_accessed=bytes_accessed,
        ),
    )(observation, w1, w2, w3, w4p, b_packed)

    return out_padded[:B]


def init_params(key):
    """Deterministic parameter init matching the nn.Linear shapes.

    PyTorch nn.Linear stores weight as (out_features, in_features) with
    U(-1/sqrt(in), 1/sqrt(in)) init; we generate in that convention and
    transpose to (in, out) for x @ W + b.  Weights are stored in bf16 (MXU
    operands); biases stay f32.  Also builds the kernel-side padded fc4
    weight (16, 128) and the packed (4, 128) f32 bias slab.
    """
    sizes = [(32, 8), (64, 32), (16, 64), (3, 16)]
    params = {}
    for i, (out_f, in_f) in enumerate(sizes, start=1):
        key, kw, kb = jax.random.split(key, 3)
        bound = 1.0 / jnp.sqrt(jnp.float32(in_f))
        w_torch = jax.random.uniform(kw, (out_f, in_f), jnp.float32, -bound, bound)
        b_torch = jax.random.uniform(kb, (out_f,), jnp.float32, -bound, bound)
        params[f"w{i}"] = jnp.transpose(w_torch).astype(jnp.bfloat16)   # (in, out)
        params[f"b{i}"] = b_torch                                       # (out,) f32

    # Lane-dense padded fc4 weight for the MXU: (16, 3) -> (16, 128), bf16.
    params["w4p"] = jnp.pad(params["w4"], ((0, 0), (0, _W4_PAD - _OUT)))

    # Packed f32 bias slab (4, 128), zero-padded per row.
    bp = jnp.zeros((4, _W4_PAD), jnp.float32)
    bp = bp.at[0, :32].set(params["b1"])
    bp = bp.at[1, :64].set(params["b2"])
    bp = bp.at[2, :16].set(params["b3"])
    bp = bp.at[3, :_OUT].set(params["b4"])
    params["b_packed"] = bp
    return params


def _reference_forward(observation, params):
    """Pure-JAX reference with matching numerics (bf16 operands, f32 accumulate)."""
    bf16 = jnp.bfloat16
    f32 = jnp.float32
    h = jnp.asarray(observation, f32)
    h = jnp.maximum(
        jnp.dot(h.astype(bf16), params["w1"], preferred_element_type=f32)
        + params["b1"], 0.0)
    h = jnp.maximum(
        jnp.dot(h.astype(bf16), params["w2"], preferred_element_type=f32)
        + params["b2"], 0.0)
    h = jnp.maximum(
        jnp.dot(h.astype(bf16), params["w3"], preferred_element_type=f32)
        + params["b3"], 0.0)
    return (jnp.dot(h.astype(bf16), params["w4"], preferred_element_type=f32)
            + params["b4"])


if __name__ == "__main__":
    key = jax.random.PRNGKey(0)
    key, kx = jax.random.split(key)

    batch = 8
    observation = jax.random.normal(kx, (batch, 8), jnp.float32)

    params = init_params(key)

    out = deep_q_forward(observation, params)
    out = jax.block_until_ready(out)

    ref = _reference_forward(observation, params)
    assert out.shape == (batch, _OUT), out.shape
    assert jnp.allclose(out, ref, atol=2e-3, rtol=2e-3), (
        f"max abs err {jnp.max(jnp.abs(out - ref))}")

    # Also exercise a ragged, multi-tile batch to verify the grid / parallel path.
    key, kx2 = jax.random.split(key)
    big_obs = jax.random.normal(kx2, (3000, 8), jnp.float32)
    big_out = jax.block_until_ready(deep_q_forward(big_obs, params))
    big_ref = _reference_forward(big_obs, params)
    assert big_out.shape == (3000, _OUT), big_out.shape
    assert jnp.allclose(big_out, big_ref, atol=2e-3, rtol=2e-3), (
        f"max abs err {jnp.max(jnp.abs(big_out - big_ref))}")

    print("KERNEL_OK")
</pallas_src>

<mosaic_0001>
module attributes {stable_mosaic.version = 11 : i64} {
  func.func @_mlp_kernel(%arg0: i32, %arg1: memref<16x8xf32, #tpu.memory_space<vmem>>, %arg2: memref<8x32xbf16, #tpu.memory_space<vmem>>, %arg3: memref<32x64xbf16, #tpu.memory_space<vmem>>, %arg4: memref<64x16xbf16, #tpu.memory_space<vmem>>, %arg5: memref<16x128xbf16, #tpu.memory_space<vmem>>, %arg6: memref<4x128xf32, #tpu.memory_space<vmem>>, %arg7: memref<16x3xf32, #tpu.memory_space<vmem>>) attributes {dimension_semantics = [#tpu.dimension_semantics<parallel>], iteration_bounds = array<i64: 1>, scalar_prefetch = 0 : i64, scratch_operands = 0 : i64, tpu.core_type = #tpu.core_type<tc>, window_params = [{transform_indices = @transform_0, window_bounds = array<i64: 16, 8>}, {pipeline_mode = #tpu.pipeline_mode<synchronous>, transform_indices = @transform_1, window_bounds = array<i64: 8, 32>}, {pipeline_mode = #tpu.pipeline_mode<synchronous>, transform_indices = @transform_2, window_bounds = array<i64: 32, 64>}, {pipeline_mode = #tpu.pipeline_mode<synchronous>, transform_indices = @transform_3, window_bounds = array<i64: 64, 16>}, {pipeline_mode = #tpu.pipeline_mode<synchronous>, transform_indices = @transform_4, window_bounds = array<i64: 16, 128>}, {pipeline_mode = #tpu.pipeline_mode<synchronous>, transform_indices = @transform_5, window_bounds = array<i64: 4, 128>}, {transform_indices = @transform_6, window_bounds = array<i64: 16, 3>}]} {
    %c0 = arith.constant 0 : index
    %c0_0 = arith.constant 0 : index
    %0 = vector.load %arg1[%c0, %c0_0] : memref<16x8xf32, #tpu.memory_space<vmem>>, vector<16x8xf32>
    %1 = arith.truncf %0 : vector<16x8xf32> to vector<16x8xbf16>
    %c0_1 = arith.constant 0 : index
    %c0_2 = arith.constant 0 : index
    %2 = vector.load %arg6[%c0_1, %c0_2] : memref<4x128xf32, #tpu.memory_space<vmem>>, vector<1x32xf32>
    %c1 = arith.constant 1 : index
    %c0_3 = arith.constant 0 : index
    %3 = vector.load %arg6[%c1, %c0_3] : memref<4x128xf32, #tpu.memory_space<vmem>>, vector<1x64xf32>
    %c2 = arith.constant 2 : index
    %c0_4 = arith.constant 0 : index
    %4 = vector.load %arg6[%c2, %c0_4] : memref<4x128xf32, #tpu.memory_space<vmem>>, vector<1x16xf32>
    %c3 = arith.constant 3 : index
    %c0_5 = arith.constant 0 : index
    %5 = vector.load %arg6[%c3, %c0_5] : memref<4x128xf32, #tpu.memory_space<vmem>>, vector<1x3xf32>
    %c0_6 = arith.constant 0 : index
    %c0_7 = arith.constant 0 : index
    %6 = vector.load %arg2[%c0_6, %c0_7] : memref<8x32xbf16, #tpu.memory_space<vmem>>, vector<8x32xbf16>
    %cst = arith.constant dense<0.000000e+00> : vector<16x32xf32>
    %7 = tpu.matmul %1, %6, %cst {dimension_numbers = #tpu.dot_dimension_numbers<[1], [0], [0], [1], [0, 0, 1, 1], [], []>} : vector<16x8xbf16>, vector<8x32xbf16>, vector<16x32xf32> -> vector<16x32xf32>
    %8 = vector.broadcast %2 : vector<1x32xf32> to vector<16x32xf32>
    %9 = arith.addf %7, %8 : vector<16x32xf32>
    %cst_8 = arith.constant 0.000000e+00 : f32
    %10 = vector.broadcast %cst_8 : f32 to vector<16x32xf32>
    %11 = arith.maximumf %9, %10 : vector<16x32xf32>
    %12 = arith.truncf %11 : vector<16x32xf32> to vector<16x32xbf16>
    %c0_9 = arith.constant 0 : index
    %c0_10 = arith.constant 0 : index
    %13 = vector.load %arg3[%c0_9, %c0_10] : memref<32x64xbf16, #tpu.memory_space<vmem>>, vector<32x64xbf16>
    %cst_11 = arith.constant dense<0.000000e+00> : vector<16x64xf32>
    %14 = tpu.matmul %12, %13, %cst_11 {dimension_numbers = #tpu.dot_dimension_numbers<[1], [0], [0], [1], [0, 0, 1, 1], [], []>} : vector<16x32xbf16>, vector<32x64xbf16>, vector<16x64xf32> -> vector<16x64xf32>
    %15 = vector.broadcast %3 : vector<1x64xf32> to vector<16x64xf32>
    %16 = arith.addf %14, %15 : vector<16x64xf32>
    %cst_12 = arith.constant 0.000000e+00 : f32
    %17 = vector.broadcast %cst_12 : f32 to vector<16x64xf32>
    %18 = arith.maximumf %16, %17 : vector<16x64xf32>
    %19 = arith.truncf %18 : vector<16x64xf32> to vector<16x64xbf16>
    %c0_13 = arith.constant 0 : index
    %c0_14 = arith.constant 0 : index
    %20 = vector.load %arg4[%c0_13, %c0_14] : memref<64x16xbf16, #tpu.memory_space<vmem>>, vector<64x16xbf16>
    %cst_15 = arith.constant dense<0.000000e+00> : vector<16x16xf32>
    %21 = tpu.matmul %19, %20, %cst_15 {dimension_numbers = #tpu.dot_dimension_numbers<[1], [0], [0], [1], [0, 0, 1, 1], [], []>} : vector<16x64xbf16>, vector<64x16xbf16>, vector<16x16xf32> -> vector<16x16xf32>
    %22 = vector.broadcast %4 : vector<1x16xf32> to vector<16x16xf32>
    %23 = arith.addf %21, %22 : vector<16x16xf32>
    %cst_16 = arith.constant 0.000000e+00 : f32
    %24 = vector.broadcast %cst_16 : f32 to vector<16x16xf32>
    %25 = arith.maximumf %23, %24 : vector<16x16xf32>
    %26 = arith.truncf %25 : vector<16x16xf32> to vector<16x16xbf16>
    %c0_17 = arith.constant 0 : index
    %c0_18 = arith.constant 0 : index
    %27 = vector.load %arg5[%c0_17, %c0_18] : memref<16x128xbf16, #tpu.memory_space<vmem>>, vector<16x128xbf16>
    %cst_19 = arith.constant dense<0.000000e+00> : vector<16x128xf32>
    %28 = tpu.matmul %26, %27, %cst_19 {dimension_numbers = #tpu.dot_dimension_numbers<[1], [0], [0], [1], [0, 0, 1, 1], [], []>} : vector<16x16xbf16>, vector<16x128xbf16>, vector<16x128xf32> -> vector<16x128xf32>
    %29 = vector.extract_strided_slice %28 {offsets = [0, 0], sizes = [16, 3], strides = [1, 1]} : vector<16x128xf32> to vector<16x3xf32>
    %30 = vector.broadcast %5 : vector<1x3xf32> to vector<16x3xf32>
    %31 = arith.addf %29, %30 : vector<16x3xf32>
    %c0_20 = arith.constant 0 : index
    %c0_21 = arith.constant 0 : index
    %32 = vector.load %arg7[%c0_20, %c0_21] : memref<16x3xf32, #tpu.memory_space<vmem>>, vector<16x3xf32>
    tpu.vector_store %arg7[%c0_20, %c0_21], %31 {strides = array<i32>} : memref<16x3xf32, #tpu.memory_space<vmem>>, vector<16x3xf32>,
    return
  }
  func.func @transform_0(%arg0: i32) -> (i32, i32) {
    %c0_i32 = arith.constant 0 : i32
    %c0_i32_0 = arith.constant 0 : i32
    return %arg0, %c0_i32 : i32, i32
  }
  func.func @transform_1(%arg0: i32) -> (i32, i32) {
    %c0_i32 = arith.constant 0 : i32
    %c0_i32_0 = arith.constant 0 : i32
    %c0_i32_1 = arith.constant 0 : i32
    return %c0_i32, %c0_i32_0 : i32, i32
  }
  func.func @transform_2(%arg0: i32) -> (i32, i32) {
    %c0_i32 = arith.constant 0 : i32
    %c0_i32_0 = arith.constant 0 : i32
    %c0_i32_1 = arith.constant 0 : i32
    return %c0_i32, %c0_i32_0 : i32, i32
  }
  func.func @transform_3(%arg0: i32) -> (i32, i32) {
    %c0_i32 = arith.constant 0 : i32
    %c0_i32_0 = arith.constant 0 : i32
    %c0_i32_1 = arith.constant 0 : i32
    return %c0_i32, %c0_i32_0 : i32, i32
  }
  func.func @transform_4(%arg0: i32) -> (i32, i32) {
    %c0_i32 = arith.constant 0 : i32
    %c0_i32_0 = arith.constant 0 : i32
    %c0_i32_1 = arith.constant 0 : i32
    return %c0_i32, %c0_i32_0 : i32, i32
  }
  func.func @transform_5(%arg0: i32) -> (i32, i32) {
    %c0_i32 = arith.constant 0 : i32
    %c0_i32_0 = arith.constant 0 : i32
    %c0_i32_1 = arith.constant 0 : i32
    return %c0_i32, %c0_i32_0 : i32, i32
  }
  func.func @transform_6(%arg0: i32) -> (i32, i32) {
    %c0_i32 = arith.constant 0 : i32
    %c0_i32_0 = arith.constant 0 : i32
    return %arg0, %c0_i32 : i32, i32
  }
}

</mosaic_0001>

<llo_original>
// kernel: deep_q_forward.1
$region0: #{deep_q_forward.1}
  #allocation0 [shape = 'u32[]', space=smem, size = 0x4, offset = 0x4, fixed_abs, tag = 'smem constant byte address 0x4 - core index']
  #allocation1 [shape = 'u32[72,128]{1,0:T(1,128)}', space=vmem, size = 0x9000, scoped, tag = 'internal scratch']
  %s0 = inlined_call_operand.vmem [shape: f32[16,8], index: 0, kind: input, shape index: {}]
  %s1 = inlined_call_operand.vmem [shape: bf16[8,32], index: 1, kind: input, shape index: {}]
  %s2 = inlined_call_operand.vmem [shape: bf16[32,64], index: 2, kind: input, shape index: {}]
  %s3 = inlined_call_operand.vmem [shape: bf16[64,16], index: 3, kind: input, shape index: {}]
  %s4 = inlined_call_operand.vmem [shape: bf16[16,128], index: 4, kind: input, shape index: {}]
  %s5 = inlined_call_operand.vmem [shape: f32[4,128], index: 5, kind: input, shape index: {}]
  %s6 = inlined_call_operand.vmem [shape: f32[16,3], index: 6, kind: output, shape index: {}]
  %s7 = sld [smem:[#allocation0]]
  $region34: #{deep_q_forward.1} parent=0
    _
  %s9 = ssub.s32 1, %s7
  %s10 = scalar_select 0, %s9, %s7
  // Predicated region
  $region2: #{deep_q_forward.1} parent=0 // pred_check
    _
  $region3: #{deep_q_forward.1} parent=0 // pred_check_branch
    %12 = sbr.rel (0) target = $region5
  $region4: #{deep_q_forward.1} parent=0 // pred_region
    _
  $region5: #{deep_q_forward.1} parent=0 // pred_fallthru
    _
  // Predicated region
  $region6: #{deep_q_forward.1} parent=0 // pred_check
    _
  $region7: #{deep_q_forward.1} parent=0 // pred_check_branch
    %14 = sbr.rel (0) target = $region9
  $region8: #{deep_q_forward.1} parent=0 // pred_region
    _
  $region9: #{deep_q_forward.1} parent=0 // pred_fallthru
    _
  // Predicated region
  $region10: #{deep_q_forward.1} parent=0 // pred_check
    _
  $region11: #{deep_q_forward.1} parent=0 // pred_check_branch
    %16 = sbr.rel (0) target = $region13
  $region12: #{deep_q_forward.1} parent=0 // pred_region
    _
  $region13: #{deep_q_forward.1} parent=0 // pred_fallthru
    _
  // Predicated region
  $region14: #{deep_q_forward.1} parent=0 // pred_check
    _
  $region15: #{deep_q_forward.1} parent=0 // pred_check_branch
    %18 = sbr.rel (0) target = $region17
  $region16: #{deep_q_forward.1} parent=0 // pred_region
    _
  $region17: #{deep_q_forward.1} parent=0 // pred_fallthru
    _
  // Predicated region
  $region18: #{deep_q_forward.1} parent=0 // pred_check
    _
  $region19: #{deep_q_forward.1} parent=0 // pred_check_branch
    %20 = sbr.rel (0) target = $region21
  $region20: #{deep_q_forward.1} parent=0 // pred_region
    _
  $region21: #{deep_q_forward.1} parent=0 // pred_fallthru
    _
  // Predicated region
  $region22: #{deep_q_forward.1} parent=0 // pred_check
    _
  $region23: #{deep_q_forward.1} parent=0 // pred_check_branch
    %22 = sbr.rel (0) target = $region25
  $region24: #{deep_q_forward.1} parent=0 // pred_region
    _
  $region25: #{deep_q_forward.1} parent=0 // pred_fallthru
    _
  %v24 = vld [vmem:[%s0] sm:$0xff]
  %v25 = vld [vmem:[%s0 + $0x8] sm:$0xff]
  %v26 = vpack.c.bf16 %v25, %v24
  %v27 = vld [vmem:[%s5] sm:$0x1]
  %v28 = vld [vmem:[%s5 + $0x1] sm:$0x1]
  %v29 = vld [vmem:[%s5 + $0x2] sm:$0x1]
  %v30 = vld [vmem:[%s5 + $0x3] sm:$0x1]
  %v31 = vld [vmem:[%s1] sm:$0xf]
  %v32 = vperm.slane %v27, 0
  %vm33 = vcmask 64512
  %v35 = vsel %vm33, %v26, 0
  %vm37 = vcmask 1043456
  %v39 = vsel %vm37, %v31, 0
  %41 = vmatpush.bf16.msra.mxu0 0
  %42 = vmatpush.bf16.msra.mxu0 0
  %43 = vmatpush.bf16.msra.mxu0 0
  %44 = vmatpush.bf16.msra.mxu0 0
  %45 = vmatpush.bf16.msra.mxu0 0
  %46 = vmatpush.bf16.msra.mxu0 0
  %47 = vmatpush.bf16.msra.mxu0 0
  %48 = vmatpush.bf16.msra.mxu0 %v39
  %49 = vmatmul.bf16.gmra.mxu0 %v35
  %v50 = vpop.f32.mrf.mxu0
  %v51 = vadd.f32 %v32, %v50
  %v52 = vpop.f32.mrf.mxu0
  %v53 = vadd.f32 %v32, %v52
  %54 = vdwg.mxu0
  %v55 = vmax.f32 %v51, 0.0
  %v56 = vmax.f32 %v53, 0.0
  %v57 = vpack.c.bf16 %v56, %v55
  %v58 = vld [vmem:[%s2] sm:$0xf]
  %v59 = vld [vmem:[%s2 + $0x4] sm:$0xf]
  %v60 = vld [vmem:[%s2 + $0x8] sm:$0xf]
  %v61 = vld [vmem:[%s2 + $0xc] sm:$0xf]
  %v62 = vperm.slane %v28, 0
  %v67 = vunpack.c.l.b16 %v58
  %v68 = vunpack.c.l.b16 %v59
  %v69 = vunpack.c.l.b16 %v60
  %v70 = vunpack.c.l.b16 %v61
  %v71 = vpack.c.b16 %v68, %v67
  %v72 = vpack.c.b16 %v70, %v69
  %vm75 = vcmask 261120
  %v77 = vsel %vm75, %v57, 0
  %79 = vmatpush.bf16.msra.mxu0 0
  %80 = vmatpush.bf16.msra.mxu0 0
  %81 = vmatpush.bf16.msra.mxu0 0
  %82 = vmatpush.bf16.msra.mxu0 0
  %83 = vmatpush.bf16.msra.mxu0 0
  %84 = vmatpush.bf16.msra.mxu0 0
  %85 = vmatpush.bf16.msra.mxu0 %v72
  %86 = vmatpush.bf16.msra.mxu0 %v71
  %87 = vmatmul.bf16.gmra.mxu0 %v77
  %v88 = vpop.f32.mrf.mxu0
  %v89 = vadd.f32 %v62, %v88
  %v90 = vpop.f32.mrf.mxu0
  %v91 = vadd.f32 %v62, %v90
  %92 = vdwg.mxu0
  %v93 = vmax.f32 %v89, 0.0
  %v94 = vmax.f32 %v91, 0.0
  %v95 = vpack.c.bf16 %v94, %v93
  %v96 = vld [vmem:[%s3] sm:$0xf]
  %v97 = vld [vmem:[%s3 + $0x4] sm:$0xf]
  %v98 = vld [vmem:[%s3 + $0x8] sm:$0xf]
  %v99 = vld [vmem:[%s3 + $0xc] sm:$0xf]
  %v100 = vld [vmem:[%s3 + $0x10] sm:$0xf]
  %v101 = vld [vmem:[%s3 + $0x14] sm:$0xf]
  %v102 = vld [vmem:[%s3 + $0x18] sm:$0xf]
  %v103 = vld [vmem:[%s3 + $0x1c] sm:$0xf]
  %v104 = vperm.slane %v29, 0
  %v113 = vunpack.c.l.b16 %v96
  %v114 = vunpack.c.l.b16 %v97
  %v115 = vunpack.c.l.b16 %v98
  %v116 = vunpack.c.l.b16 %v99
  %v117 = vunpack.c.l.b16 %v100
  %v118 = vunpack.c.l.b16 %v101
  %v119 = vunpack.c.l.b16 %v102
  %v120 = vunpack.c.l.b16 %v103
  %v121 = vpack.c.b16 %v114, %v113
  %v122 = vpack.c.b16 %v116, %v115
  %v123 = vpack.c.b16 %v118, %v117
  %v124 = vpack.c.b16 %v120, %v119
  %vm129 = vcmask 523264
  %v131 = vsel %vm129, %v95, 0
  %133 = vmatpush.bf16.msra.mxu0 0
  %134 = vmatpush.bf16.msra.mxu0 0
  %135 = vmatpush.bf16.msra.mxu0 0
  %136 = vmatpush.bf16.msra.mxu0 0
  %137 = vmatpush.bf16.msra.mxu0 %v124
  %138 = vmatpush.bf16.msra.mxu0 %v123
  %139 = vmatpush.bf16.msra.mxu0 %v122
  %140 = vmatpush.bf16.msra.mxu0 %v121
  %141 = vmatmul.bf16.gmra.mxu0 %v131
  %v142 = vpop.f32.mrf.mxu0
  %v143 = vadd.f32 %v104, %v142
  %v144 = vpop.f32.mrf.mxu0
  %v145 = vadd.f32 %v104, %v144
  %146 = vdwg.mxu0
  %v147 = vmax.f32 %v143, 0.0
  %v148 = vmax.f32 %v145, 0.0
  %v149 = vpack.c.bf16 %v148, %v147
  %v150 = vld [vmem:[%s4] sm:$0xf]
  %v151 = vld [vmem:[%s4 + $0x4] sm:$0xf]
  %v154 = vunpack.c.l.b16 %v150
  %v155 = vunpack.c.l.b16 %v151
  %v156 = vpack.c.b16 %v155, %v154
  %vm158 = vcmask 130048
  %v160 = vsel %vm158, %v149, 0
  %162 = vmatpush.bf16.msra.mxu0 0
  %163 = vmatpush.bf16.msra.mxu0 0
  %164 = vmatpush.bf16.msra.mxu0 0
  %165 = vmatpush.bf16.msra.mxu0 0
  %166 = vmatpush.bf16.msra.mxu0 0
  %167 = vmatpush.bf16.msra.mxu0 0
  %168 = vmatpush.bf16.msra.mxu0 0
  %169 = vmatpush.bf16.msra.mxu0 %v156
  %170 = vmatmul.bf16.gmra.mxu0 %v160
  %v171 = vpop.f32.mrf.mxu0
  %v172 = vadd.f32 0.0, %v171
  %v173 = vpop.f32.mrf.mxu0
  %v174 = vadd.f32 0.0, %v173
  %175 = vdwg.mxu0
  %v176 = vperm.slane %v30, 0
  %v177 = vadd.f32 %v172, %v176
  %v178 = vadd.f32 %v174, %v176
  %vm179 = vcmask 23552
  %180 = vst.msk [vmem:[%s6] sm:$0xff] %vm179, %v177
  %181 = vst.msk [vmem:[%s6 + $0x8] sm:$0xff] %vm179, %v178
  // Predicated region
  $region26: #{deep_q_forward.1} parent=0 // pred_check
    _
  $region27: #{deep_q_forward.1} parent=0 // pred_check_branch
    %183 = sbr.rel (0) target = $region29
  $region28: #{deep_q_forward.1} parent=0 // pred_region
    _
  $region29: #{deep_q_forward.1} parent=0 // pred_fallthru
    _
  // Predicated region
  $region30: #{deep_q_forward.1} parent=0 // pred_check
    _
  $region31: #{deep_q_forward.1} parent=0 // pred_check_branch
    %185 = sbr.rel (0) target = $region33
  $region32: #{deep_q_forward.1} parent=0 // pred_region
    _
  $region33: #{deep_q_forward.1} parent=0 // pred_fallthru
    _

</llo_original>
